<compile_context>
chip_gen: v6e
topology: v6e:2x2x1
jax: 0.10.0
libtpu: 0.0.40
codegen_flags: <defaults>
</compile_context>

<pallas_src>
import math

import jax
import jax.numpy as jnp
from jax.experimental import pallas as pl
from jax.experimental.pallas import tpu as pltpu

_LANES = 512             # lane-axis width of the flattened layout (multiple of 128)
_SUBLANES = 8            # f32 sublane tile
_MAX_TILE_GROUPS = 128   # 128 * 8 * 512 * 4 B = 2 MiB per input tile


def _round_up(x, m):
    return ((x + m - 1) // m) * m


def _bce_sum_kernel(pred_ref, tgt_ref, out_ref, acc_ref):
    """Accumulates the per-element BCE sum over the inner ('arbitrary') axis."""
    i = pl.program_id(1)

    @pl.when(i == 0)
    def _init():
        acc_ref[...] = jnp.zeros_like(acc_ref)

    p = pred_ref[...].astype(jnp.float32)            # (G, 8, LANES)
    t = tgt_ref[...].astype(jnp.float32)

    # torch.nn.BCELoss clamps its log terms at -100.
    log_p = jnp.maximum(jnp.log(p), -100.0)
    log_1mp = jnp.maximum(jnp.log(1.0 - p), -100.0)
    bce = -(t * log_p + (1.0 - t) * log_1mp)         # (G, 8, LANES)

    # Leading-axis partial reduce (plain vreg adds) into a vreg-shaped
    # accumulator; no cross-lane reduce on the per-step critical path.
    acc_ref[...] += jnp.sum(bce, axis=0, keepdims=True)

    @pl.when(i == pl.num_programs(1) - 1)
    def _finalize():
        out_ref[...] = acc_ref[...]


def binary_segmentation_loss(ypred, ytgt, *, num_cores=2,
                             max_tile_groups=_MAX_TILE_GROUPS):
    """BCELoss(ypred, ytgt) with 'mean' reduction, matching torch.nn.BCELoss."""
    assert ypred.shape == ytgt.shape
    n = math.prod(ypred.shape)

    # TODO(synk): keep f32 end-to-end for parity; a bf16 input cast would halve
    # HBM bytes at the cost of a small numeric divergence from the reference.
    p_flat = ypred.reshape(-1).astype(jnp.float32)
    t_flat = ytgt.reshape(-1).astype(jnp.float32)

    elems_per_group = _SUBLANES * _LANES                      # 4096
    groups = -(-n // elems_per_group)
    tile_groups = min(max_tile_groups, groups)
    groups_padded = _round_up(groups, tile_groups * num_cores)
    n_padded = groups_padded * elems_per_group
    pad = n_padded - n
    if pad:
        # (pred=1, tgt=1) contributes exactly 0 to the BCE sum.
        p_flat = jnp.concatenate([p_flat, jnp.ones((pad,), jnp.float32)])
        t_flat = jnp.concatenate([t_flat, jnp.ones((pad,), jnp.float32)])

    pred3d = p_flat.reshape(groups_padded, _SUBLANES, _LANES)
    tgt3d = t_flat.reshape(groups_padded, _SUBLANES, _LANES)

    tiles_per_core = groups_padded // (tile_groups * num_cores)
    in_map = lambda c, i: (c * tiles_per_core + i, 0, 0)

    partials = pl.pallas_call(
        _bce_sum_kernel,
        out_shape=jax.ShapeDtypeStruct((num_cores, _SUBLANES, _LANES),
                                       jnp.float32),
        grid_spec=pltpu.PrefetchScalarGridSpec(
            num_scalar_prefetch=0,
            grid=(num_cores, tiles_per_core),
            in_specs=[
                pl.BlockSpec((tile_groups, _SUBLANES, _LANES), in_map),
                pl.BlockSpec((tile_groups, _SUBLANES, _LANES), in_map),
            ],
            out_specs=pl.BlockSpec((1, _SUBLANES, _LANES),
                                   lambda c, i: (c, 0, 0)),
            scratch_shapes=[pltpu.VMEM((1, _SUBLANES, _LANES), jnp.float32)],
        ),
        compiler_params=pltpu.CompilerParams(
            dimension_semantics=("parallel", "arbitrary")),
    )(pred3d, tgt3d)

    # Single tiny cross-lane / cross-core reduce + mean normalization
    # (divide by the *true* element count, not the padded one).
    return jnp.sum(partials) / jnp.float32(n)


def _reference(ypred, ytgt):
    p = ypred.astype(jnp.float32)
    t = ytgt.astype(jnp.float32)
    log_p = jnp.maximum(jnp.log(p), -100.0)
    log_1mp = jnp.maximum(jnp.log(1.0 - p), -100.0)
    return jnp.mean(-(t * log_p + (1.0 - t) * log_1mp))


if __name__ == "__main__":
    key = jax.random.PRNGKey(0)
    k1, k2 = jax.random.split(key)

    # NOTE: the module's pos_weight ctor arg is unused by torch.nn.BCELoss.
    b, c, h, w = 2, 4, 16, 16
    ypred = jax.random.uniform(k1, (b, c, h, w), jnp.float32,
                               minval=0.02, maxval=0.98)
    ytgt = jax.random.bernoulli(k2, 0.3, (b, c, h, w)).astype(jnp.float32)

    loss = binary_segmentation_loss(ypred, ytgt)
    loss = jax.block_until_ready(loss)

    ref = _reference(ypred, ytgt)
    assert jnp.allclose(loss, ref, rtol=1e-5, atol=1e-6), (loss, ref)

    print("KERNEL_OK")
</pallas_src>

<mosaic_0001>
module attributes {stable_mosaic.version = 11 : i64} {
  func.func @_bce_sum_kernel(%arg0: i32, %arg1: i32, %arg2: memref<1x8x512xf32, #tpu.memory_space<vmem>>, %arg3: memref<1x8x512xf32, #tpu.memory_space<vmem>>, %arg4: memref<1x8x512xf32, #tpu.memory_space<vmem>>, %arg5: memref<1x8x512xf32, #tpu.memory_space<vmem>>) attributes {dimension_semantics = [#tpu.dimension_semantics<parallel>, #tpu.dimension_semantics<arbitrary>], iteration_bounds = array<i64: 2, 1>, scalar_prefetch = 0 : i64, scratch_operands = 1 : i64, tpu.core_type = #tpu.core_type<tc>, window_params = [{transform_indices = @transform_0, window_bounds = array<i64: 1, 8, 512>}, {transform_indices = @transform_1, window_bounds = array<i64: 1, 8, 512>}, {transform_indices = @transform_2, window_bounds = array<i64: 1, 8, 512>}]} {
    %c0_i32 = arith.constant 0 : i32
    %0 = arith.cmpi eq, %arg1, %c0_i32 : i32
    %1 = arith.extui %0 : i1 to i32
    %c0_i32_0 = arith.constant 0 : i32
    %2 = arith.cmpi ne, %1, %c0_i32_0 : i32
    scf.if %2 {
      %cst_19 = arith.constant 0.000000e+00 : f32
      %28 = vector.broadcast %cst_19 : f32 to vector<1x8x512xf32>
      %c0_20 = arith.constant 0 : index
      %c0_21 = arith.constant 0 : index
      %c0_22 = arith.constant 0 : index
      %29 = vector.load %arg5[%c0_20, %c0_21, %c0_22] : memref<1x8x512xf32, #tpu.memory_space<vmem>>, vector<1x8x512xf32>
      tpu.vector_store %arg5[%c0_20, %c0_21, %c0_22], %28 {strides = array<i32>} : memref<1x8x512xf32, #tpu.memory_space<vmem>>, vector<1x8x512xf32>,
    } else {
    }
    %c0 = arith.constant 0 : index
    %c0_1 = arith.constant 0 : index
    %c0_2 = arith.constant 0 : index
    %3 = vector.load %arg2[%c0, %c0_1, %c0_2] : memref<1x8x512xf32, #tpu.memory_space<vmem>>, vector<1x8x512xf32>
    %c0_3 = arith.constant 0 : index
    %c0_4 = arith.constant 0 : index
    %c0_5 = arith.constant 0 : index
    %4 = vector.load %arg3[%c0_3, %c0_4, %c0_5] : memref<1x8x512xf32, #tpu.memory_space<vmem>>, vector<1x8x512xf32>
    %5 = math.log %3 : vector<1x8x512xf32>
    %cst = arith.constant -1.000000e+02 : f32
    %6 = vector.broadcast %cst : f32 to vector<1x8x512xf32>
    %7 = arith.maximumf %5, %6 : vector<1x8x512xf32>
    %cst_6 = arith.constant 1.000000e+00 : f32
    %8 = vector.broadcast %cst_6 : f32 to vector<1x8x512xf32>
    %9 = arith.subf %8, %3 : vector<1x8x512xf32>
    %10 = math.log %9 : vector<1x8x512xf32>
    %cst_7 = arith.constant -1.000000e+02 : f32
    %11 = vector.broadcast %cst_7 : f32 to vector<1x8x512xf32>
    %12 = arith.maximumf %10, %11 : vector<1x8x512xf32>
    %13 = arith.mulf %4, %7 : vector<1x8x512xf32>
    %cst_8 = arith.constant 1.000000e+00 : f32
    %14 = vector.broadcast %cst_8 : f32 to vector<1x8x512xf32>
    %15 = arith.subf %14, %4 : vector<1x8x512xf32>
    %16 = arith.mulf %15, %12 : vector<1x8x512xf32>
    %17 = arith.addf %13, %16 : vector<1x8x512xf32>
    %cst_9 = arith.constant 0.000000e+00 : f32
    %18 = vector.broadcast %cst_9 : f32 to vector<1x8x512xf32>
    %19 = arith.subf %18, %17 : vector<1x8x512xf32>
    %c0_10 = arith.constant 0 : index
    %c0_11 = arith.constant 0 : index
    %c0_12 = arith.constant 0 : index
    %20 = vector.load %arg5[%c0_10, %c0_11, %c0_12] : memref<1x8x512xf32, #tpu.memory_space<vmem>>, vector<1x8x512xf32>
    %cst_13 = arith.constant dense<0.000000e+00> : vector<8x512xf32>
    %21 = vector.multi_reduction <add>, %19, %cst_13 [0] : vector<1x8x512xf32> to vector<8x512xf32>
    %22 = vector.shape_cast %21 : vector<8x512xf32> to vector<1x8x512xf32>
    %23 = arith.addf %20, %22 : vector<1x8x512xf32>
    %c0_14 = arith.constant 0 : index
    %c0_15 = arith.constant 0 : index
    %c0_16 = arith.constant 0 : index
    %24 = vector.load %arg5[%c0_14, %c0_15, %c0_16] : memref<1x8x512xf32, #tpu.memory_space<vmem>>, vector<1x8x512xf32>
    tpu.vector_store %arg5[%c0_14, %c0_15, %c0_16], %23 {strides = array<i32>} : memref<1x8x512xf32, #tpu.memory_space<vmem>>, vector<1x8x512xf32>,
    %c0_i32_17 = arith.constant 0 : i32
    %25 = arith.cmpi eq, %arg1, %c0_i32_17 : i32
    %26 = arith.extui %25 : i1 to i32
    %c0_i32_18 = arith.constant 0 : i32
    %27 = arith.cmpi ne, %26, %c0_i32_18 : i32
    scf.if %27 {
      %c0_19 = arith.constant 0 : index
      %c0_20 = arith.constant 0 : index
      %c0_21 = arith.constant 0 : index
      %28 = vector.load %arg5[%c0_19, %c0_20, %c0_21] : memref<1x8x512xf32, #tpu.memory_space<vmem>>, vector<1x8x512xf32>
      %c0_22 = arith.constant 0 : index
      %c0_23 = arith.constant 0 : index
      %c0_24 = arith.constant 0 : index
      %29 = vector.load %arg4[%c0_22, %c0_23, %c0_24] : memref<1x8x512xf32, #tpu.memory_space<vmem>>, vector<1x8x512xf32>
      tpu.vector_store %arg4[%c0_22, %c0_23, %c0_24], %28 {strides = array<i32>} : memref<1x8x512xf32, #tpu.memory_space<vmem>>, vector<1x8x512xf32>,
    } else {
    }
    return
  }
  func.func @transform_0(%arg0: i32, %arg1: i32) -> (i32, i32, i32) {
    %c1_i32 = arith.constant 1 : i32
    %0 = arith.muli %arg0, %c1_i32 : i32
    %1 = arith.addi %0, %arg1 : i32
    %c0_i32 = arith.constant 0 : i32
    %c0_i32_0 = arith.constant 0 : i32
    %c0_i32_1 = arith.constant 0 : i32
    return %1, %c0_i32, %c0_i32_0 : i32, i32, i32
  }
  func.func @transform_1(%arg0: i32, %arg1: i32) -> (i32, i32, i32) {
    %c1_i32 = arith.constant 1 : i32
    %0 = arith.muli %arg0, %c1_i32 : i32
    %1 = arith.addi %0, %arg1 : i32
    %c0_i32 = arith.constant 0 : i32
    %c0_i32_0 = arith.constant 0 : i32
    %c0_i32_1 = arith.constant 0 : i32
    return %1, %c0_i32, %c0_i32_0 : i32, i32, i32
  }
  func.func @transform_2(%arg0: i32, %arg1: i32) -> (i32, i32, i32) {
    %c0_i32 = arith.constant 0 : i32
    %c0_i32_0 = arith.constant 0 : i32
    %c0_i32_1 = arith.constant 0 : i32
    return %arg0, %c0_i32, %c0_i32_0 : i32, i32, i32
  }
}

</mosaic_0001>

<llo_original>
// kernel: tpu_custom_call.1
$region0: #{tpu_custom_call.1}
  #allocation0 [shape = 'u32[]', space=smem, size = 0x4, offset = 0x4, fixed_abs, tag = 'smem constant byte address 0x4 - core index']
  #allocation1 [shape = 'u32[144,128]{1,0:T(1,128)}', space=vmem, size = 0x12000, scoped, tag = 'internal scratch']
  #allocation2 [shape = 'f32[1,8,512]{2,1,0:T(8,128)}', space=vmem, size = 0x4000, scoped, tag = 'scratch operand']
  %s0 = inlined_call_operand.hbm [shape: f32[2,8,512], index: 0, kind: input, shape index: {}]
  %s1 = inlined_call_operand.hbm [shape: f32[2,8,512], index: 1, kind: input, shape index: {}]
  %s2 = inlined_call_operand.hbm [shape: f32[2,8,512], index: 2, kind: output, shape index: {}]
  %s3 = sld [smem:[#allocation0]]
  $region57: #{tpu_custom_call.1} parent=0
    _
  %s5 = ssub.s32 1, %s3
  %s6 = scalar_select 0, %s5, %s3
  $region1: #{tpu_custom_call.1} parent=0
    #allocation3 [shape = 'u8[32768]{0}', space=vmem, size = 0x8000, scoped, tag = 'input window, operand 0']
    #allocation4 [shape = 's32[2]{0}', space=sflag, size = 0x8, scoped, tag = 'scoped memory for tpu_custom_call.1']
    #allocation5 [shape = 's32[2]{0}', space=sflag, size = 0x8, scoped, tag = 'scoped memory for tpu_custom_call.1']
    #allocation6 [shape = 'u8[32768]{0}', space=vmem, size = 0x8000, scoped, tag = 'input window, operand 1']
    #allocation7 [shape = 's32[2]{0}', space=sflag, size = 0x8, scoped, tag = 'scoped memory for tpu_custom_call.1']
    #allocation8 [shape = 'u8[32768]{0}', space=vmem, size = 0x8000, scoped, tag = 'output window, operand 0']
    %7 = vsyncpa [#allocation4], 0
    %s8 = scalar_lea.sflag [#allocation4], 1
    %9 = vsyncpa %s8, 0
    %10 = vsyncpa [#allocation7], 0
    %s11 = scalar_lea.sflag [#allocation7], 1
    %12 = vsyncpa %s11, 0
    %13 = vsyncpa [#allocation5], 0
    %s14 = scalar_lea.sflag [#allocation5], 1
    %15 = vsyncpa %s14, 0
    loop: start=0, step=1, limit=4
    $region2: #{tpu_custom_call.1} parent=1 // loop_pre_header
      _
    $region3: #{tpu_custom_call.1} parent=1 // loop_header
      %s17 = sphi 0, %s21
      %p18 = scmp.ge.s32.totalorder %s17, 4
      %s24 = sphi 0, %s36
      %s25 = sphi 0, %s32
      %s26 = sphi 0, %s24
      %s27 = sphi 0, %s25
      %s28 = sphi 0, %s26
      %s29 = sphi 0, %s27
      %s41 = sphi 0, %s43
      %s44 = sphi 0, %s41
      %s45 = sphi 0, %s44
      %s61 = sphi 0, %s45
      %s69 = sphi 0, %s71
      %s72 = sphi 0, %s69
      %s73 = sphi 0, %s72
      %s89 = sphi 0, %s73
      %s95 = sphi 0, %s97
      %s98 = sphi 0, %s95
      %s99 = sphi 0, %s98
      %s115 = sphi 0, %s99
    $region4: #{tpu_custom_call.1} parent=1 // loop_header_branch
      %20 = sbr.rel (%p18) target = $region8
    $region5: #{tpu_custom_call.1} parent=1 // loop_body
      %s22 = ssub.s32 %s17, 1
      %s23 = ssub.s32 %s17, 2
      %s30 = sadd.s32 1, %s25
      %p31 = scmp.ge.s32.totalorder %s30, 1
      %s32 = scalar_select %p31, 0, %s30
      %s33 = sadd.s32 1, %s24
      %s34 = scalar_select %p31, %s33, %s24
      %p35 = scmp.ge.s32.totalorder %s34, 2
      %s36 = scalar_select %p35, 0, %s34
      %s37 = sadd.s32 %s24, %s25
      %s38 = sadd.s32 %s36, %s32
      %s39 = ssub.s32 %s37, %s38
      %p40 = scmp.eq.s32.totalorder %s39, 0
      %s42 = sadd.s32 %s41, 1
      %s43 = scalar_select %p40, %s41, %s42
      %p46 = pneg %p40
      %p47 = scmp.eq.s32.totalorder %s17, 1
      %p48 = por %p46, %p47
      %p49 = scmp.ne.s32.totalorder %s41, %s44
      %p50 = scmp.eq.s32.totalorder %s17, 0
      %p51 = por %p49, %p50
      %p52 = scmp.ne.s32.totalorder %s41, %s44
      %p53 = scmp.eq.s32.totalorder %s22, 1
      %p54 = por %p52, %p53
      %p55 = scmp.ne.s32.totalorder %s44, %s45
      %p56 = scmp.eq.s32.totalorder %s22, 0
      %p57 = por %p55, %p56
      %p58 = scmp.ne.s32.totalorder %s44, %s45
      %p59 = scmp.eq.s32.totalorder %s23, 1
      %p60 = por %p58, %p59
      %p62 = scmp.ne.s32.totalorder %s45, %s61
      %p63 = scmp.eq.s32.totalorder %s23, 0
      %p64 = por %p62, %p63
      %s65 = sadd.s32 %s24, %s25
      %s66 = sadd.s32 %s36, %s32
      %s67 = ssub.s32 %s65, %s66
      %p68 = scmp.eq.s32.totalorder %s67, 0
      %s70 = sadd.s32 %s69, 1
      %s71 = scalar_select %p68, %s69, %s70
      %p74 = pneg %p68
      %p75 = scmp.eq.s32.totalorder %s17, 1
      %p76 = por %p74, %p75
      %p77 = scmp.ne.s32.totalorder %s69, %s72
      %p78 = scmp.eq.s32.totalorder %s17, 0
      %p79 = por %p77, %p78
      %p80 = scmp.ne.s32.totalorder %s69, %s72
      %p81 = scmp.eq.s32.totalorder %s22, 1
      %p82 = por %p80, %p81
      %p83 = scmp.ne.s32.totalorder %s72, %s73
      %p84 = scmp.eq.s32.totalorder %s22, 0
      %p85 = por %p83, %p84
      %p86 = scmp.ne.s32.totalorder %s72, %s73
      %p87 = scmp.eq.s32.totalorder %s23, 1
      %p88 = por %p86, %p87
      %p90 = scmp.ne.s32.totalorder %s73, %s89
      %p91 = scmp.eq.s32.totalorder %s23, 0
      %p92 = por %p90, %p91
      %s93 = ssub.s32 %s24, %s36
      %p94 = scmp.eq.s32.totalorder %s93, 0
      %s96 = sadd.s32 %s95, 1
      %s97 = scalar_select %p94, %s95, %s96
      %p100 = pneg %p94
      %p101 = scmp.eq.s32.totalorder %s17, 1
      %p102 = por %p100, %p101
      %p103 = scmp.ne.s32.totalorder %s95, %s98
      %p104 = scmp.eq.s32.totalorder %s17, 0
      %p105 = por %p103, %p104
      %p106 = scmp.ne.s32.totalorder %s95, %s98
      %p107 = scmp.eq.s32.totalorder %s22, 1
      %p108 = por %p106, %p107
      %p109 = scmp.ne.s32.totalorder %s98, %s99
      %p110 = scmp.eq.s32.totalorder %s22, 0
      %p111 = por %p109, %p110
      %p112 = scmp.ne.s32.totalorder %s98, %s99
      %p113 = scmp.eq.s32.totalorder %s23, 1
      %p114 = por %p112, %p113
      %p116 = scmp.ne.s32.totalorder %s99, %s115
      %p117 = scmp.eq.s32.totalorder %s23, 0
      %p118 = por %p116, %p117
      %p119 = scmp.le.s32.totalorder 1, %s17
      %p120 = scmp.lt.s32.totalorder %s17, 3
      %p121 = pnand %p119, %p120
      %p122 = pneg %p121
      // Predicated region
      $region9: #{tpu_custom_call.1} parent=5 // pred_check
        _
      $region10: #{tpu_custom_call.1} parent=5 // pred_check_branch
        %124 = sbr.rel (%p121) target = $region12
      $region11: #{tpu_custom_call.1} parent=5 // pred_region
        %s125 = ssub.s32 %s17, 1
      $region12: #{tpu_custom_call.1} parent=5 // pred_fallthru
        _
      %p126 = scmp.lt.s32.totalorder %s17, 2
      // Predicated region
      $region13: #{tpu_custom_call.1} parent=5 // pred_check
        %p127 = pneg %p126
      $region14: #{tpu_custom_call.1} parent=5 // pred_check_branch
        %129 = sbr.rel (%p127) target = $region16
      $region15: #{tpu_custom_call.1} parent=5 // pred_region
        // Predicated region
        $region17: #{tpu_custom_call.1} parent=15 // pred_check
          %p130 = pneg %p51
        $region18: #{tpu_custom_call.1} parent=15 // pred_check_branch
          %132 = sbr.rel (%p130) target = $region20
        $region19: #{tpu_custom_call.1} parent=15 // pred_region
          %s133 = sand.u32 %s41, 1
          %s134 = scalar_lea.sflag [#allocation4], %s133
          %s135 = sand.u32 %s41, 1
          %s136 = smul.addr %s135, 32
          %s137 = scalar_lea.vmem [#allocation3], %s136
          %s138 = sadd.s32 %s24, %s25
          %s140 = ssub.s32 512, 512
          %141 = vsyncadd %s134, %s140
          %s142 = smul.addr %s138, 4
          %s143 = smul.addr %s142, 128
          %s144 = scalar_lea.hbm %s0, %s143
          %s146 = sshll.u32 %s137, 4
          %s147 = int_to_ptr.vmem [resolvable:$true] %s146
          %149 = dma.hbm_to_vmem [thread:$0]  %s144, 512, %s147, %s134
        $region20: #{tpu_custom_call.1} parent=15 // pred_fallthru
          _
        // Predicated region
        $region21: #{tpu_custom_call.1} parent=15 // pred_check
          %p150 = pneg %p79
        $region22: #{tpu_custom_call.1} parent=15 // pred_check_branch
          %152 = sbr.rel (%p150) target = $region24
        $region23: #{tpu_custom_call.1} parent=15 // pred_region
          %s153 = sand.u32 %s69, 1
          %s154 = scalar_lea.sflag [#allocation7], %s153
          %s155 = sand.u32 %s69, 1
          %s156 = smul.addr %s155, 32
          %s157 = scalar_lea.vmem [#allocation6], %s156
          %s158 = sadd.s32 %s24, %s25
          %s160 = ssub.s32 512, 512
          %161 = vsyncadd %s154, %s160
          %s162 = smul.addr %s158, 4
          %s163 = smul.addr %s162, 128
          %s164 = scalar_lea.hbm %s1, %s163
          %s166 = sshll.u32 %s157, 4
          %s167 = int_to_ptr.vmem [resolvable:$true] %s166
          %169 = dma.hbm_to_vmem [thread:$0]  %s164, 512, %s167, %s154
        $region24: #{tpu_custom_call.1} parent=15 // pred_fallthru
          _
      $region16: #{tpu_custom_call.1} parent=5 // pred_fallthru
        _
      %p170 = scmp.le.s32.totalorder 1, %s17
      %p171 = scmp.lt.s32.totalorder %s17, 3
      %p172 = pnand %p170, %p171
      %p173 = pneg %p172
      // Predicated region
      $region25: #{tpu_custom_call.1} parent=5 // pred_check
        _
      $region26: #{tpu_custom_call.1} parent=5 // pred_check_branch
        %175 = sbr.rel (%p172) target = $region28
      $region27: #{tpu_custom_call.1} parent=5 // pred_region
        %s176 = ssub.s32 %s17, 1
        %s177 = sand.u32 %s44, 1
        %s178 = scalar_lea.sflag [#allocation4], %s177
        %s179 = sand.u32 %s44, 1
        %s180 = smul.addr %s179, 32
        %s181 = scalar_lea.vmem [#allocation3], %s180
        // Predicated region
        $region29: #{tpu_custom_call.1} parent=27 // pred_check
          %p182 = pneg %p57
        $region30: #{tpu_custom_call.1} parent=27 // pred_check_branch
          %184 = sbr.rel (%p182) target = $region32
        $region31: #{tpu_custom_call.1} parent=27 // pred_region
          %185 = dma.done %s178, 512
        $region32: #{tpu_custom_call.1} parent=27 // pred_fallthru
          _
        %s186 = sand.u32 %s72, 1
        %s187 = scalar_lea.sflag [#allocation7], %s186
        %s188 = sand.u32 %s72, 1
        %s189 = smul.addr %s188, 32
        %s190 = scalar_lea.vmem [#allocation6], %s189
        // Predicated region
        $region33: #{tpu_custom_call.1} parent=27 // pred_check
          %p191 = pneg %p85
        $region34: #{tpu_custom_call.1} parent=27 // pred_check_branch
          %193 = sbr.rel (%p191) target = $region36
        $region35: #{tpu_custom_call.1} parent=27 // pred_region
          %194 = dma.done %s187, 512
        $region36: #{tpu_custom_call.1} parent=27 // pred_fallthru
          _
        %s195 = sand.u32 %s44, 1
        %s196 = scalar_lea.sflag [#allocation4], %s195
        %s197 = sand.u32 %s44, 1
        %s198 = smul.addr %s197, 32
        %s199 = scalar_lea.vmem [#allocation3], %s198
        %p200 = pneg %p57
        %p201 = pneg %p54
        %s202 = sand.u32 %s72, 1
        %s203 = scalar_lea.sflag [#allocation7], %s202
        %s204 = sand.u32 %s72, 1
        %s205 = smul.addr %s204, 32
        %s206 = scalar_lea.vmem [#allocation6], %s205
        %p207 = pneg %p85
        %p208 = pneg %p82
        %p209 = pneg %p111
        %p210 = pneg %p108
        %s211 = sand.u32 %s98, 1
        %s212 = scalar_lea.sflag [#allocation5], %s211
        %s213 = sand.u32 %s98, 1
        %s214 = smul.addr %s213, 32
        %s215 = scalar_lea.vmem [#allocation8], %s214
        %s216 = sadd.s32 %s26, %s27
        %s217 = sadd.s32 %s26, %s27
        %p218 = scmp.eq.s32.totalorder %s27, 0
        // Predicated region
        $region37: #{tpu_custom_call.1} parent=27 // pred_check
          %p219 = pneg %p218
        $region38: #{tpu_custom_call.1} parent=27 // pred_check_branch
          %221 = sbr.rel (%p219) target = $region40
        $region39: #{tpu_custom_call.1} parent=27 // pred_region
          %222 = vst [vmem:[#allocation2] sm:$0xff] 0.0
          %223 = vst [vmem:[#allocation2 + $0x8] sm:$0xff] 0.0
          %224 = vst [vmem:[#allocation2 + $0x10] sm:$0xff] 0.0
          %225 = vst [vmem:[#allocation2 + $0x18] sm:$0xff] 0.0
        $region40: #{tpu_custom_call.1} parent=27 // pred_fallthru
          _
        %v226 = vld [vmem:[%s181] sm:$0xff]
        %v227 = vld [vmem:[%s181 + $0x8] sm:$0xff]
        %v228 = vld [vmem:[%s181 + $0x10] sm:$0xff]
        %v229 = vld [vmem:[%s181 + $0x18] sm:$0xff]
        %v230 = vld [vmem:[%s190] sm:$0xff]
        %v231 = vld [vmem:[%s190 + $0x8] sm:$0xff]
        %v232 = vld [vmem:[%s190 + $0x10] sm:$0xff]
        %v233 = vld [vmem:[%s190 + $0x18] sm:$0xff]
        %v234 = vlog2.pop %v226
        %v235 = vmul.f32 %v234, 0.6931472
        %v236 = vlog2.pop %v227
        %v237 = vmul.f32 %v236, 0.6931472
        %v238 = vlog2.pop %v228
        %v239 = vmul.f32 %v238, 0.6931472
        %v240 = vlog2.pop %v229
        %v241 = vmul.f32 %v240, 0.6931472
        %v242 = vmax.f32 %v235, -100.0
        %v243 = vmax.f32 %v237, -100.0
        %v244 = vmax.f32 %v239, -100.0
        %v245 = vmax.f32 %v241, -100.0
        %v246 = vsub.f32 1.0, %v226
        %v247 = vsub.f32 1.0, %v227
        %v248 = vsub.f32 1.0, %v228
        %v249 = vsub.f32 1.0, %v229
        %v250 = vlog2.pop %v246
        %v251 = vmul.f32 %v250, 0.6931472
        %v252 = vlog2.pop %v247
        %v253 = vmul.f32 %v252, 0.6931472
        %v254 = vlog2.pop %v248
        %v255 = vmul.f32 %v254, 0.6931472
        %v256 = vlog2.pop %v249
        %v257 = vmul.f32 %v256, 0.6931472
        %v258 = vmax.f32 %v251, -100.0
        %v259 = vmax.f32 %v253, -100.0
        %v260 = vmax.f32 %v255, -100.0
        %v261 = vmax.f32 %v257, -100.0
        %v262 = vmul.f32 %v230, %v242
        %v263 = vmul.f32 %v231, %v243
        %v264 = vmul.f32 %v232, %v244
        %v265 = vmul.f32 %v233, %v245
        %v266 = vsub.f32 1.0, %v230
        %v267 = vsub.f32 1.0, %v231
        %v268 = vsub.f32 1.0, %v232
        %v269 = vsub.f32 1.0, %v233
        %v270 = vmul.f32 %v266, %v258
        %v271 = vmul.f32 %v267, %v259
        %v272 = vmul.f32 %v268, %v260
        %v273 = vmul.f32 %v269, %v261
        %v274 = vadd.f32 %v262, %v270
        %v275 = vadd.f32 %v263, %v271
        %v276 = vadd.f32 %v264, %v272
        %v277 = vadd.f32 %v265, %v273
        %v278 = vsub.f32 0.0, %v274
        %v279 = vsub.f32 0.0, %v275
        %v280 = vsub.f32 0.0, %v276
        %v281 = vsub.f32 0.0, %v277
        %v282 = vld [vmem:[#allocation2] sm:$0xff]
        %v283 = vld [vmem:[#allocation2 + $0x8] sm:$0xff]
        %v284 = vld [vmem:[#allocation2 + $0x10] sm:$0xff]
        %v285 = vld [vmem:[#allocation2 + $0x18] sm:$0xff]
        %v286 = vadd.f32 %v278, 0.0
        %v287 = vadd.f32 %v279, 0.0
        %v288 = vadd.f32 %v280, 0.0
        %v289 = vadd.f32 %v281, 0.0
        %v290 = vadd.f32 %v282, %v286
        %v291 = vadd.f32 %v283, %v287
        %v292 = vadd.f32 %v284, %v288
        %v293 = vadd.f32 %v285, %v289
        %294 = vst [vmem:[#allocation2] sm:$0xff] %v290
        %295 = vst [vmem:[#allocation2 + $0x8] sm:$0xff] %v291
        %296 = vst [vmem:[#allocation2 + $0x10] sm:$0xff] %v292
        %297 = vst [vmem:[#allocation2 + $0x18] sm:$0xff] %v293
        // Predicated region
        $region41: #{tpu_custom_call.1} parent=27 // pred_check
          %p298 = pneg %p218
        $region42: #{tpu_custom_call.1} parent=27 // pred_check_branch
          %300 = sbr.rel (%p298) target = $region44
        $region43: #{tpu_custom_call.1} parent=27 // pred_region
          %v301 = vld [vmem:[#allocation2] sm:$0xff]
          %v302 = vld [vmem:[#allocation2 + $0x8] sm:$0xff]
          %v303 = vld [vmem:[#allocation2 + $0x10] sm:$0xff]
          %v304 = vld [vmem:[#allocation2 + $0x18] sm:$0xff]
          %305 = vst [vmem:[%s215] sm:$0xff] %v301
          %306 = vst [vmem:[%s215 + $0x8] sm:$0xff] %v302
          %307 = vst [vmem:[%s215 + $0x10] sm:$0xff] %v303
          %308 = vst [vmem:[%s215 + $0x18] sm:$0xff] %v304
        $region44: #{tpu_custom_call.1} parent=27 // pred_fallthru
          _
        %s309 = sand.u32 %s98, 1
        %s310 = scalar_lea.sflag [#allocation5], %s309
        %s311 = sand.u32 %s98, 1
        %s312 = smul.addr %s311, 32
        %s313 = scalar_lea.vmem [#allocation8], %s312
        // Predicated region
        $region45: #{tpu_custom_call.1} parent=27 // pred_check
          %p314 = pneg %p108
        $region46: #{tpu_custom_call.1} parent=27 // pred_check_branch
          %316 = sbr.rel (%p314) target = $region48
        $region47: #{tpu_custom_call.1} parent=27 // pred_region
          %s318 = ssub.s32 512, 512
          %319 = vsyncadd %s310, %s318
          %s320 = smul.addr %s26, 4
          %s321 = smul.addr %s320, 128
          %s322 = scalar_lea.hbm %s2, %s321
          %s324 = sshll.u32 %s313, 4
          %s325 = int_to_ptr.vmem [resolvable:$true] %s324
          %327 = dma.vmem_to_hbm [thread:$0]  %s325, 512, %s322, %s310
        $region48: #{tpu_custom_call.1} parent=27 // pred_fallthru
          _
      $region28: #{tpu_custom_call.1} parent=5 // pred_fallthru
        _
      %p328 = scmp.le.s32.totalorder 2, %s17
      // Predicated region
      $region49: #{tpu_custom_call.1} parent=5 // pred_check
        %p329 = pneg %p328
      $region50: #{tpu_custom_call.1} parent=5 // pred_check_branch
        %331 = sbr.rel (%p329) target = $region52
      $region51: #{tpu_custom_call.1} parent=5 // pred_region
        %s332 = ssub.s32 %s17, 2
        // Predicated region
        $region53: #{tpu_custom_call.1} parent=51 // pred_check
          %p333 = pneg %p114
        $region54: #{tpu_custom_call.1} parent=51 // pred_check_branch
          %335 = sbr.rel (%p333) target = $region56
        $region55: #{tpu_custom_call.1} parent=51 // pred_region
          %s336 = sand.u32 %s99, 1
          %s337 = scalar_lea.sflag [#allocation5], %s336
          %s338 = sand.u32 %s99, 1
          %s339 = smul.addr %s338, 32
          %s340 = scalar_lea.vmem [#allocation8], %s339
          %341 = dma.done %s337, 512
        $region56: #{tpu_custom_call.1} parent=51 // pred_fallthru
          _
      $region52: #{tpu_custom_call.1} parent=5 // pred_fallthru
        _
    $region6: #{tpu_custom_call.1} parent=1 // loop_footer
      %s21 = sadd.s32 1, %s17
    $region7: #{tpu_custom_call.1} parent=1 // loop_footer_branch
      %16 = sbr.rel target = $region3
    $region8: #{tpu_custom_call.1} parent=1 // loop_exit
      _
    %342 = vsyncpa [#allocation4], 1
    %s343 = scalar_lea.sflag [#allocation4], 1
    %344 = vsyncpa %s343, 1
    %345 = vsyncpa [#allocation7], 1
    %s346 = scalar_lea.sflag [#allocation7], 1
    %347 = vsyncpa %s346, 1
    %348 = vsyncpa [#allocation5], 1
    %s349 = scalar_lea.sflag [#allocation5], 1
    %350 = vsyncpa %s349, 1

</llo_original>
